<compile_context>
chip_gen: v7x
topology: tpu7x:2x2x1
jax: 0.10.0
libtpu: 0.0.40
codegen_flags: <defaults>
</compile_context>

<pallas_src>
import functools
import math

import jax
import jax.numpy as jnp
from jax.experimental import pallas as pl
from jax.experimental.pallas import tpu as pltpu


def _round_up(x: int, m: int) -> int:
    return ((x + m - 1) // m) * m


def _mlp_fused_kernel(*refs, num_layers: int, compute_dtype):
    """refs = (x_ref, w0, b0, w1, b1, ..., o_ref).

    x_ref: (TM, K0)   w_i: (Kp_i, Np_i)   b_i: (1, Np_i) f32   o_ref: (TM, NLp)
    Computes y = relu(... relu(x @ W0 + b0) ...) @ W_{L-1} + b_{L-1}
    entirely in VMEM/vregs for the current M-tile.  Dot operands are
    compute_dtype (bf16 by default), accumulation / bias / ReLU are f32.
    """
    x_ref = refs[0]
    o_ref = refs[-1]
    wb_refs = refs[1:-1]

    y = x_ref[...]
    for i in range(num_layers):
        w_ref = wb_refs[2 * i]
        b_ref = wb_refs[2 * i + 1]
        y = jnp.dot(
            y.astype(compute_dtype),
            w_ref[...],
            preferred_element_type=jnp.float32,
        )
        y = y + b_ref[...]  # bias is f32
        if i < num_layers - 1:
            y = jnp.maximum(y, 0.0)
    o_ref[...] = y.astype(o_ref.dtype)


def prepare_mlp_params(params, compute_dtype=jnp.bfloat16):
    """One-time padding / casting of (W (in,out), b (out,)) pairs.

    Layer-0 K stays at its natural width (it meets x's natural width); all
    hidden / output feature dims are zero-padded to multiples of 128 and
    weights are cast to compute_dtype.  Biases stay f32.
    """
    dims = [params[0][0].shape[0]] + [w.shape[1] for (w, _) in params]
    pdims = [dims[0]] + [_round_up(d, 128) for d in dims[1:]]

    layers = []
    for li, (w, b) in enumerate(params):
        kp, npad = pdims[li], pdims[li + 1]
        w_p = jnp.pad(
            w, ((0, kp - w.shape[0]), (0, npad - w.shape[1]))
        ).astype(compute_dtype)
        b_p = jnp.pad(b, (0, npad - b.shape[0])).reshape(1, -1).astype(jnp.float32)
        layers.append((w_p, b_p))

    return {
        "layers": layers,
        "in_dim": dims[0],
        "out_dim": dims[-1],
        "pdims": pdims,
        "compute_dtype": compute_dtype,
    }


def _vmem_limit_bytes(prepared, x_itemsize, tile_m, out_itemsize):
    layers = prepared["layers"]
    pdims = prepared["pdims"]
    w_bytes = sum(
        int(w.size) * w.dtype.itemsize + int(b.size) * b.dtype.itemsize
        for (w, b) in layers
    )
    x_tile = tile_m * prepared["in_dim"] * x_itemsize
    o_tile = tile_m * pdims[-1] * out_itemsize
    interm = tile_m * max(pdims) * 4 * 4  # a few f32 temporaries per layer
    need = 2 * w_bytes + 2 * x_tile + 2 * o_tile + interm + (2 << 20)
    return int(min(max(need, 16 << 20), 100 << 20))


def mlp_forward(x, prepared, *, tile_m: int = 512, out_dtype=jnp.float32):
    """x: (..., input_dim); prepared: output of prepare_mlp_params."""
    layers = prepared["layers"]
    pdims = prepared["pdims"]
    in_dim = prepared["in_dim"]
    out_dim = prepared["out_dim"]
    compute_dtype = prepared["compute_dtype"]
    num_layers = len(layers)

    orig_shape = x.shape
    assert orig_shape[-1] == in_dim
    x2d = x.reshape(-1, in_dim)
    M = x2d.shape[0]

    # M tiling: large MXU-friendly tiles, but keep >=2 tiles when M allows so
    # v7x's 2 TensorCores both get work; ragged last block handled by Pallas.
    tile_m = max(8, min(tile_m, _round_up(pl.cdiv(M, 2), 8)))
    grid_m = pl.cdiv(M, tile_m)

    # x is DMA'd at natural width/dtype (block last dim == full array dim);
    # the bf16 cast happens inside the kernel (cheaper than a wrapper pass).
    flat_args = [x2d]
    in_specs = [pl.BlockSpec((tile_m, in_dim), lambda i: (i, 0))]

    for li, (w_p, b_p) in enumerate(layers):
        kp, npad = pdims[li], pdims[li + 1]
        flat_args += [w_p, b_p]
        # Constant index maps -> weights/biases resident in VMEM across grid.
        in_specs += [
            pl.BlockSpec((kp, npad), lambda i: (0, 0)),
            pl.BlockSpec((1, npad), lambda i: (0, 0)),
        ]

    kernel = functools.partial(
        _mlp_fused_kernel, num_layers=num_layers, compute_dtype=compute_dtype
    )

    vmem_limit = _vmem_limit_bytes(
        prepared, x2d.dtype.itemsize, tile_m, jnp.dtype(out_dtype).itemsize
    )

    out_p = pl.pallas_call(
        kernel,
        out_shape=jax.ShapeDtypeStruct((M, pdims[-1]), out_dtype),
        grid_spec=pltpu.PrefetchScalarGridSpec(
            num_scalar_prefetch=0,
            grid=(grid_m,),
            in_specs=in_specs,
            out_specs=pl.BlockSpec((tile_m, pdims[-1]), lambda i: (i, 0)),
        ),
        compiler_params=pltpu.CompilerParams(
            dimension_semantics=("parallel",),
            vmem_limit_bytes=vmem_limit,
        ),
    )(*flat_args)

    out = out_p[:, :out_dim]
    return out.reshape(*orig_shape[:-1], out_dim)


def init_mlp_params(key, input_dim, hidden_dim, output_dim, num_layers):
    """Deterministic init mirroring nn.Linear default (Kaiming-uniform-ish)."""
    h = [hidden_dim] * (num_layers - 1)
    dims = list(zip([input_dim] + h, h + [output_dim]))
    params = []
    for (n_in, n_out) in dims:
        key, kw, kb = jax.random.split(key, 3)
        bound = 1.0 / math.sqrt(n_in)
        # stored as (in, out) == PyTorch weight.T
        w = jax.random.uniform(kw, (n_in, n_out), jnp.float32, -bound, bound)
        b = jax.random.uniform(kb, (n_out,), jnp.float32, -bound, bound)
        params.append((w, b))
    return params


if __name__ == "__main__":
    key = jax.random.PRNGKey(0)
    k_x, k_p = jax.random.split(key)

    batch, seq = 2, 8
    input_dim, hidden_dim, output_dim, num_layers = 16, 32, 4, 3

    x = jax.random.normal(k_x, (batch, seq, input_dim), jnp.float32)
    params = init_mlp_params(k_p, input_dim, hidden_dim, output_dim, num_layers)

    # One-time weight padding/casting (bf16 dot operands, f32 accumulation).
    prepared = prepare_mlp_params(params, compute_dtype=jnp.bfloat16)

    out = mlp_forward(x, prepared)
    out = jax.block_until_ready(out)

    # Reference in plain JAX mimicking the kernel's numerics:
    # bf16 dot operands, f32 accumulation, f32 bias + ReLU.
    ref = x.reshape(-1, input_dim).astype(jnp.float32)
    for i, (w, b) in enumerate(params):
        ref = jnp.dot(
            ref.astype(jnp.bfloat16),
            w.astype(jnp.bfloat16),
            preferred_element_type=jnp.float32,
        ) + b
        if i < num_layers - 1:
            ref = jnp.maximum(ref, 0.0)
    ref = ref.reshape(batch, seq, output_dim)

    assert out.shape == (batch, seq, output_dim)
    assert jnp.allclose(out, ref, atol=2e-3, rtol=2e-3), (
        f"max abs err = {jnp.max(jnp.abs(out - ref))}"
    )

    print("KERNEL_OK")
</pallas_src>

<mosaic_0001>
module attributes {stable_mosaic.version = 11 : i64} {
  func.func @_mlp_fused_kernel(%arg0: i32, %arg1: memref<8x16xf32, #tpu.memory_space<vmem>>, %arg2: memref<16x128xbf16, #tpu.memory_space<vmem>>, %arg3: memref<1x128xf32, #tpu.memory_space<vmem>>, %arg4: memref<128x128xbf16, #tpu.memory_space<vmem>>, %arg5: memref<1x128xf32, #tpu.memory_space<vmem>>, %arg6: memref<128x128xbf16, #tpu.memory_space<vmem>>, %arg7: memref<1x128xf32, #tpu.memory_space<vmem>>, %arg8: memref<8x128xf32, #tpu.memory_space<vmem>>) attributes {dimension_semantics = [#tpu.dimension_semantics<parallel>], iteration_bounds = array<i64: 2>, scalar_prefetch = 0 : i64, scratch_operands = 0 : i64, tpu.core_type = #tpu.core_type<tc>, window_params = [{transform_indices = @transform_0, window_bounds = array<i64: 8, 16>}, {pipeline_mode = #tpu.pipeline_mode<synchronous>, transform_indices = @transform_1, window_bounds = array<i64: 16, 128>}, {pipeline_mode = #tpu.pipeline_mode<synchronous>, transform_indices = @transform_2, window_bounds = array<i64: 1, 128>}, {pipeline_mode = #tpu.pipeline_mode<synchronous>, transform_indices = @transform_3, window_bounds = array<i64: 128, 128>}, {pipeline_mode = #tpu.pipeline_mode<synchronous>, transform_indices = @transform_4, window_bounds = array<i64: 1, 128>}, {pipeline_mode = #tpu.pipeline_mode<synchronous>, transform_indices = @transform_5, window_bounds = array<i64: 128, 128>}, {pipeline_mode = #tpu.pipeline_mode<synchronous>, transform_indices = @transform_6, window_bounds = array<i64: 1, 128>}, {transform_indices = @transform_7, window_bounds = array<i64: 8, 128>}]} {
    %c0 = arith.constant 0 : index
    %c0_0 = arith.constant 0 : index
    %0 = vector.load %arg1[%c0, %c0_0] : memref<8x16xf32, #tpu.memory_space<vmem>>, vector<8x16xf32>
    %1 = arith.truncf %0 : vector<8x16xf32> to vector<8x16xbf16>
    %c0_1 = arith.constant 0 : index
    %c0_2 = arith.constant 0 : index
    %2 = vector.load %arg2[%c0_1, %c0_2] : memref<16x128xbf16, #tpu.memory_space<vmem>>, vector<16x128xbf16>
    %cst = arith.constant dense<0.000000e+00> : vector<8x128xf32>
    %3 = tpu.matmul %1, %2, %cst {dimension_numbers = #tpu.dot_dimension_numbers<[1], [0], [0], [1], [0, 0, 1, 1], [], []>} : vector<8x16xbf16>, vector<16x128xbf16>, vector<8x128xf32> -> vector<8x128xf32>
    %c0_3 = arith.constant 0 : index
    %c0_4 = arith.constant 0 : index
    %4 = vector.load %arg3[%c0_3, %c0_4] : memref<1x128xf32, #tpu.memory_space<vmem>>, vector<1x128xf32>
    %5 = vector.broadcast %4 : vector<1x128xf32> to vector<8x128xf32>
    %6 = arith.addf %3, %5 : vector<8x128xf32>
    %cst_5 = arith.constant 0.000000e+00 : f32
    %7 = vector.broadcast %cst_5 : f32 to vector<8x128xf32>
    %8 = arith.maximumf %6, %7 : vector<8x128xf32>
    %9 = arith.truncf %8 : vector<8x128xf32> to vector<8x128xbf16>
    %c0_6 = arith.constant 0 : index
    %c0_7 = arith.constant 0 : index
    %10 = vector.load %arg4[%c0_6, %c0_7] : memref<128x128xbf16, #tpu.memory_space<vmem>>, vector<128x128xbf16>
    %cst_8 = arith.constant dense<0.000000e+00> : vector<8x128xf32>
    %11 = tpu.matmul %9, %10, %cst_8 {dimension_numbers = #tpu.dot_dimension_numbers<[1], [0], [0], [1], [0, 0, 1, 1], [], []>} : vector<8x128xbf16>, vector<128x128xbf16>, vector<8x128xf32> -> vector<8x128xf32>
    %c0_9 = arith.constant 0 : index
    %c0_10 = arith.constant 0 : index
    %12 = vector.load %arg5[%c0_9, %c0_10] : memref<1x128xf32, #tpu.memory_space<vmem>>, vector<1x128xf32>
    %13 = vector.broadcast %12 : vector<1x128xf32> to vector<8x128xf32>
    %14 = arith.addf %11, %13 : vector<8x128xf32>
    %cst_11 = arith.constant 0.000000e+00 : f32
    %15 = vector.broadcast %cst_11 : f32 to vector<8x128xf32>
    %16 = arith.maximumf %14, %15 : vector<8x128xf32>
    %17 = arith.truncf %16 : vector<8x128xf32> to vector<8x128xbf16>
    %c0_12 = arith.constant 0 : index
    %c0_13 = arith.constant 0 : index
    %18 = vector.load %arg6[%c0_12, %c0_13] : memref<128x128xbf16, #tpu.memory_space<vmem>>, vector<128x128xbf16>
    %cst_14 = arith.constant dense<0.000000e+00> : vector<8x128xf32>
    %19 = tpu.matmul %17, %18, %cst_14 {dimension_numbers = #tpu.dot_dimension_numbers<[1], [0], [0], [1], [0, 0, 1, 1], [], []>} : vector<8x128xbf16>, vector<128x128xbf16>, vector<8x128xf32> -> vector<8x128xf32>
    %c0_15 = arith.constant 0 : index
    %c0_16 = arith.constant 0 : index
    %20 = vector.load %arg7[%c0_15, %c0_16] : memref<1x128xf32, #tpu.memory_space<vmem>>, vector<1x128xf32>
    %21 = vector.broadcast %20 : vector<1x128xf32> to vector<8x128xf32>
    %22 = arith.addf %19, %21 : vector<8x128xf32>
    %c0_17 = arith.constant 0 : index
    %c0_18 = arith.constant 0 : index
    %23 = vector.load %arg8[%c0_17, %c0_18] : memref<8x128xf32, #tpu.memory_space<vmem>>, vector<8x128xf32>
    tpu.vector_store %arg8[%c0_17, %c0_18], %22 {strides = array<i32>} : memref<8x128xf32, #tpu.memory_space<vmem>>, vector<8x128xf32>,
    return
  }
  func.func @transform_0(%arg0: i32) -> (i32, i32) {
    %c0_i32 = arith.constant 0 : i32
    %c0_i32_0 = arith.constant 0 : i32
    return %arg0, %c0_i32 : i32, i32
  }
  func.func @transform_1(%arg0: i32) -> (i32, i32) {
    %c0_i32 = arith.constant 0 : i32
    %c0_i32_0 = arith.constant 0 : i32
    %c0_i32_1 = arith.constant 0 : i32
    return %c0_i32, %c0_i32_0 : i32, i32
  }
  func.func @transform_2(%arg0: i32) -> (i32, i32) {
    %c0_i32 = arith.constant 0 : i32
    %c0_i32_0 = arith.constant 0 : i32
    %c0_i32_1 = arith.constant 0 : i32
    return %c0_i32, %c0_i32_0 : i32, i32
  }
  func.func @transform_3(%arg0: i32) -> (i32, i32) {
    %c0_i32 = arith.constant 0 : i32
    %c0_i32_0 = arith.constant 0 : i32
    %c0_i32_1 = arith.constant 0 : i32
    return %c0_i32, %c0_i32_0 : i32, i32
  }
  func.func @transform_4(%arg0: i32) -> (i32, i32) {
    %c0_i32 = arith.constant 0 : i32
    %c0_i32_0 = arith.constant 0 : i32
    %c0_i32_1 = arith.constant 0 : i32
    return %c0_i32, %c0_i32_0 : i32, i32
  }
  func.func @transform_5(%arg0: i32) -> (i32, i32) {
    %c0_i32 = arith.constant 0 : i32
    %c0_i32_0 = arith.constant 0 : i32
    %c0_i32_1 = arith.constant 0 : i32
    return %c0_i32, %c0_i32_0 : i32, i32
  }
  func.func @transform_6(%arg0: i32) -> (i32, i32) {
    %c0_i32 = arith.constant 0 : i32
    %c0_i32_0 = arith.constant 0 : i32
    %c0_i32_1 = arith.constant 0 : i32
    return %c0_i32, %c0_i32_0 : i32, i32
  }
  func.func @transform_7(%arg0: i32) -> (i32, i32) {
    %c0_i32 = arith.constant 0 : i32
    %c0_i32_0 = arith.constant 0 : i32
    return %arg0, %c0_i32 : i32, i32
  }
}

</mosaic_0001>

<llo_original>
// kernel: tpu_custom_call.1
$region0: #{tpu_custom_call.1}
  #allocation0 [shape = 'u32[]', space=smem, size = 0x4, offset = 0x4, fixed_abs, tag = 'smem constant byte address 0x4 - core index']
  #allocation1 [shape = 'u32[144,128]{1,0:T(1,128)}', space=vmem, size = 0x12000, scoped, tag = 'internal scratch']
  %s0 = inlined_call_operand.hbm [shape: f32[16,16], index: 0, kind: input, shape index: {}]
  %s1 = inlined_call_operand.hbm [shape: bf16[16,128], index: 1, kind: input, shape index: {}]
  %s2 = inlined_call_operand.vmem [shape: f32[1,128], index: 2, kind: input, shape index: {}]
  %s3 = inlined_call_operand.hbm [shape: bf16[128,128], index: 3, kind: input, shape index: {}]
  %s4 = inlined_call_operand.vmem [shape: f32[1,128], index: 4, kind: input, shape index: {}]
  %s5 = inlined_call_operand.hbm [shape: bf16[128,128], index: 5, kind: input, shape index: {}]
  %s6 = inlined_call_operand.vmem [shape: f32[1,128], index: 6, kind: input, shape index: {}]
  %s7 = inlined_call_operand.hbm [shape: f32[16,128], index: 7, kind: output, shape index: {}]
  %s8 = sld [smem:[#allocation0]]
  $region77: #{tpu_custom_call.1} parent=0
    _
  %s10 = ssub.s32 1, %s8
  %s11 = scalar_select 0, %s10, %s8
  $region1: #{tpu_custom_call.1} parent=0
    #allocation2 [shape = 'u8[8192]{0}', space=vmem, size = 0x2000, scoped, tag = 'input window, operand 0']
    #allocation3 [shape = 's32[2]{0}', space=sflag, size = 0x8, scoped, tag = 'scoped memory for tpu_custom_call.1']
    #allocation4 [shape = 's32[2]{0}', space=sflag, size = 0x8, scoped, tag = 'scoped memory for tpu_custom_call.1']
    #allocation5 [shape = 'u8[4096]{0}', space=vmem, size = 0x1000, scoped, tag = 'input window, operand 1, single buffered']
    #allocation6 [shape = 's32[1]{0}', space=sflag, size = 0x4, scoped, tag = 'scoped memory for tpu_custom_call.1']
    #allocation7 [shape = 'u8[32768]{0}', space=vmem, size = 0x8000, scoped, tag = 'input window, operand 3, single buffered']
    #allocation8 [shape = 'u8[32768]{0}', space=vmem, size = 0x8000, scoped, tag = 'input window, operand 5, single buffered']
    #allocation9 [shape = 's32[1]{0}', space=sflag, size = 0x4, scoped, tag = 'scoped memory for tpu_custom_call.1']
    #allocation10 [shape = 'u8[8192]{0}', space=vmem, size = 0x2000, scoped, tag = 'output window, operand 0']
    %12 = vsyncpa [#allocation3], 0
    %s13 = scalar_lea.sflag [#allocation3], 1
    %14 = vsyncpa %s13, 0
    %15 = vsyncpa [#allocation6], 0
    %16 = vsyncpa [#allocation9], 0
    %17 = vsyncpa [#allocation4], 0
    %s18 = scalar_lea.sflag [#allocation4], 1
    %19 = vsyncpa %s18, 0
    loop: start=0, step=1, limit=4
    $region2: #{tpu_custom_call.1} parent=1 // loop_pre_header
      _
    $region3: #{tpu_custom_call.1} parent=1 // loop_header
      %s21 = sphi 0, %s25
      %p22 = scmp.ge.s32.totalorder %s21, 4
      %s31 = sphi 0, %s33
      %s34 = sphi 0, %s31
      %s35 = sphi 0, %s34
      %s51 = sphi 0, %s35
      %s55 = sphi 0, %s55
      %s57 = sphi 0, %s55
      %s58 = sphi 0, %s57
      %s72 = sphi 0, %s58
      %s76 = sphi 0, %s76
      %s78 = sphi 0, %s76
      %s79 = sphi 0, %s78
      %s93 = sphi 0, %s79
      %s97 = sphi 0, %s97
      %s99 = sphi 0, %s97
      %s100 = sphi 0, %s99
      %s114 = sphi 0, %s100
      %s118 = sphi 0, %s118
      %s120 = sphi 0, %s118
      %s121 = sphi 0, %s120
      %s135 = sphi 0, %s121
      %s139 = sphi 0, %s139
      %s141 = sphi 0, %s139
      %s142 = sphi 0, %s141
      %s156 = sphi 0, %s142
      %s160 = sphi 0, %s160
      %s162 = sphi 0, %s160
      %s163 = sphi 0, %s162
      %s177 = sphi 0, %s163
      %s183 = sphi 0, %s185
      %s186 = sphi 0, %s183
      %s187 = sphi 0, %s186
      %s203 = sphi 0, %s187
    $region4: #{tpu_custom_call.1} parent=1 // loop_header_branch
      %24 = sbr.rel (%p22) target = $region8
    $region5: #{tpu_custom_call.1} parent=1 // loop_body
      %s26 = ssub.s32 %s21, 1
      %s27 = ssub.s32 %s21, 2
      %s28 = sadd.s32 %s21, 1
      %s29 = ssub.s32 %s21, %s28
      %p30 = scmp.eq.s32.totalorder %s29, 0
      %s32 = sadd.s32 %s31, 1
      %s33 = scalar_select %p30, %s31, %s32
      %p36 = pneg %p30
      %p37 = scmp.eq.s32.totalorder %s21, 1
      %p38 = por %p36, %p37
      %p39 = scmp.ne.s32.totalorder %s31, %s34
      %p40 = scmp.eq.s32.totalorder %s21, 0
      %p41 = por %p39, %p40
      %p42 = scmp.ne.s32.totalorder %s31, %s34
      %p43 = scmp.eq.s32.totalorder %s26, 1
      %p44 = por %p42, %p43
      %p45 = scmp.ne.s32.totalorder %s34, %s35
      %p46 = scmp.eq.s32.totalorder %s26, 0
      %p47 = por %p45, %p46
      %p48 = scmp.ne.s32.totalorder %s34, %s35
      %p49 = scmp.eq.s32.totalorder %s27, 1
      %p50 = por %p48, %p49
      %p52 = scmp.ne.s32.totalorder %s35, %s51
      %p53 = scmp.eq.s32.totalorder %s27, 0
      %p54 = por %p52, %p53
      %s56 = sadd.s32 %s55, 1
      %p59 = scmp.eq.s32.totalorder %s21, 1
      %p60 = scmp.ne.s32.totalorder %s55, %s57
      %p61 = scmp.eq.s32.totalorder %s21, 0
      %p62 = por %p60, %p61
      %p63 = scmp.ne.s32.totalorder %s55, %s57
      %p64 = scmp.eq.s32.totalorder %s26, 1
      %p65 = por %p63, %p64
      %p66 = scmp.ne.s32.totalorder %s57, %s58
      %p67 = scmp.eq.s32.totalorder %s26, 0
      %p68 = por %p66, %p67
      %p69 = scmp.ne.s32.totalorder %s57, %s58
      %p70 = scmp.eq.s32.totalorder %s27, 1
      %p71 = por %p69, %p70
      %p73 = scmp.ne.s32.totalorder %s58, %s72
      %p74 = scmp.eq.s32.totalorder %s27, 0
      %p75 = por %p73, %p74
      %s77 = sadd.s32 %s76, 1
      %p80 = scmp.eq.s32.totalorder %s21, 1
      %p81 = scmp.ne.s32.totalorder %s76, %s78
      %p82 = scmp.eq.s32.totalorder %s21, 0
      %p83 = por %p81, %p82
      %p84 = scmp.ne.s32.totalorder %s76, %s78
      %p85 = scmp.eq.s32.totalorder %s26, 1
      %p86 = por %p84, %p85
      %p87 = scmp.ne.s32.totalorder %s78, %s79
      %p88 = scmp.eq.s32.totalorder %s26, 0
      %p89 = por %p87, %p88
      %p90 = scmp.ne.s32.totalorder %s78, %s79
      %p91 = scmp.eq.s32.totalorder %s27, 1
      %p92 = por %p90, %p91
      %p94 = scmp.ne.s32.totalorder %s79, %s93
      %p95 = scmp.eq.s32.totalorder %s27, 0
      %p96 = por %p94, %p95
      %s98 = sadd.s32 %s97, 1
      %p101 = scmp.eq.s32.totalorder %s21, 1
      %p102 = scmp.ne.s32.totalorder %s97, %s99
      %p103 = scmp.eq.s32.totalorder %s21, 0
      %p104 = por %p102, %p103
      %p105 = scmp.ne.s32.totalorder %s97, %s99
      %p106 = scmp.eq.s32.totalorder %s26, 1
      %p107 = por %p105, %p106
      %p108 = scmp.ne.s32.totalorder %s99, %s100
      %p109 = scmp.eq.s32.totalorder %s26, 0
      %p110 = por %p108, %p109
      %p111 = scmp.ne.s32.totalorder %s99, %s100
      %p112 = scmp.eq.s32.totalorder %s27, 1
      %p113 = por %p111, %p112
      %p115 = scmp.ne.s32.totalorder %s100, %s114
      %p116 = scmp.eq.s32.totalorder %s27, 0
      %p117 = por %p115, %p116
      %s119 = sadd.s32 %s118, 1
      %p122 = scmp.eq.s32.totalorder %s21, 1
      %p123 = scmp.ne.s32.totalorder %s118, %s120
      %p124 = scmp.eq.s32.totalorder %s21, 0
      %p125 = por %p123, %p124
      %p126 = scmp.ne.s32.totalorder %s118, %s120
      %p127 = scmp.eq.s32.totalorder %s26, 1
      %p128 = por %p126, %p127
      %p129 = scmp.ne.s32.totalorder %s120, %s121
      %p130 = scmp.eq.s32.totalorder %s26, 0
      %p131 = por %p129, %p130
      %p132 = scmp.ne.s32.totalorder %s120, %s121
      %p133 = scmp.eq.s32.totalorder %s27, 1
      %p134 = por %p132, %p133
      %p136 = scmp.ne.s32.totalorder %s121, %s135
      %p137 = scmp.eq.s32.totalorder %s27, 0
      %p138 = por %p136, %p137
      %s140 = sadd.s32 %s139, 1
      %p143 = scmp.eq.s32.totalorder %s21, 1
      %p144 = scmp.ne.s32.totalorder %s139, %s141
      %p145 = scmp.eq.s32.totalorder %s21, 0
      %p146 = por %p144, %p145
      %p147 = scmp.ne.s32.totalorder %s139, %s141
      %p148 = scmp.eq.s32.totalorder %s26, 1
      %p149 = por %p147, %p148
      %p150 = scmp.ne.s32.totalorder %s141, %s142
      %p151 = scmp.eq.s32.totalorder %s26, 0
      %p152 = por %p150, %p151
      %p153 = scmp.ne.s32.totalorder %s141, %s142
      %p154 = scmp.eq.s32.totalorder %s27, 1
      %p155 = por %p153, %p154
      %p157 = scmp.ne.s32.totalorder %s142, %s156
      %p158 = scmp.eq.s32.totalorder %s27, 0
      %p159 = por %p157, %p158
      %s161 = sadd.s32 %s160, 1
      %p164 = scmp.eq.s32.totalorder %s21, 1
      %p165 = scmp.ne.s32.totalorder %s160, %s162
      %p166 = scmp.eq.s32.totalorder %s21, 0
      %p167 = por %p165, %p166
      %p168 = scmp.ne.s32.totalorder %s160, %s162
      %p169 = scmp.eq.s32.totalorder %s26, 1
      %p170 = por %p168, %p169
      %p171 = scmp.ne.s32.totalorder %s162, %s163
      %p172 = scmp.eq.s32.totalorder %s26, 0
      %p173 = por %p171, %p172
      %p174 = scmp.ne.s32.totalorder %s162, %s163
      %p175 = scmp.eq.s32.totalorder %s27, 1
      %p176 = por %p174, %p175
      %p178 = scmp.ne.s32.totalorder %s163, %s177
      %p179 = scmp.eq.s32.totalorder %s27, 0
      %p180 = por %p178, %p179
      %s181 = ssub.s32 %s21, %s28
      %p182 = scmp.eq.s32.totalorder %s181, 0
      %s184 = sadd.s32 %s183, 1
      %s185 = scalar_select %p182, %s183, %s184
      %p188 = pneg %p182
      %p189 = scmp.eq.s32.totalorder %s21, 1
      %p190 = por %p188, %p189
      %p191 = scmp.ne.s32.totalorder %s183, %s186
      %p192 = scmp.eq.s32.totalorder %s21, 0
      %p193 = por %p191, %p192
      %p194 = scmp.ne.s32.totalorder %s183, %s186
      %p195 = scmp.eq.s32.totalorder %s26, 1
      %p196 = por %p194, %p195
      %p197 = scmp.ne.s32.totalorder %s186, %s187
      %p198 = scmp.eq.s32.totalorder %s26, 0
      %p199 = por %p197, %p198
      %p200 = scmp.ne.s32.totalorder %s186, %s187
      %p201 = scmp.eq.s32.totalorder %s27, 1
      %p202 = por %p200, %p201
      %p204 = scmp.ne.s32.totalorder %s187, %s203
      %p205 = scmp.eq.s32.totalorder %s27, 0
      %p206 = por %p204, %p205
      %p207 = scmp.le.s32.totalorder 1, %s21
      %p208 = scmp.lt.s32.totalorder %s21, 3
      %p209 = pnand %p207, %p208
      %p210 = pneg %p209
      // Predicated region
      $region9: #{tpu_custom_call.1} parent=5 // pred_check
        _
      $region10: #{tpu_custom_call.1} parent=5 // pred_check_branch
        %212 = sbr.rel (%p209) target = $region12
      $region11: #{tpu_custom_call.1} parent=5 // pred_region
        %s213 = ssub.s32 %s21, 1
        // Predicated region
        $region13: #{tpu_custom_call.1} parent=11 // pred_check
          %p214 = pneg %p68
        $region14: #{tpu_custom_call.1} parent=11 // pred_check_branch
          %216 = sbr.rel (%p214) target = $region16
        $region15: #{tpu_custom_call.1} parent=11 // pred_region
          %s218 = ssub.s32 128, 128
          %219 = vsyncadd [#allocation6], %s218
          %s220 = sshll.u32 [#allocation5], 4
          %s221 = int_to_ptr.vmem [resolvable:$true] %s220
          %226 = dma.hbm_to_vmem [thread:$0]  %s1, 128, %s221, [#allocation6], 64, 64, 4
        $region16: #{tpu_custom_call.1} parent=11 // pred_fallthru
          _
        // Predicated region
        $region17: #{tpu_custom_call.1} parent=11 // pred_check
          %p227 = pneg %p89
        $region18: #{tpu_custom_call.1} parent=11 // pred_check_branch
          %229 = sbr.rel (%p227) target = $region20
        $region19: #{tpu_custom_call.1} parent=11 // pred_region
          _
        $region20: #{tpu_custom_call.1} parent=11 // pred_fallthru
          _
        // Predicated region
        $region21: #{tpu_custom_call.1} parent=11 // pred_check
          %p230 = pneg %p110
        $region22: #{tpu_custom_call.1} parent=11 // pred_check_branch
          %232 = sbr.rel (%p230) target = $region24
        $region23: #{tpu_custom_call.1} parent=11 // pred_region
          %s234 = ssub.s32 1024, 1024
          %235 = vsyncadd [#allocation6], %s234
          %s236 = sshll.u32 [#allocation7], 4
          %s237 = int_to_ptr.vmem [resolvable:$true] %s236
          %242 = dma.hbm_to_vmem [thread:$0]  %s3, 1024, %s237, [#allocation6], 64, 64, 4
        $region24: #{tpu_custom_call.1} parent=11 // pred_fallthru
          _
        // Predicated region
        $region25: #{tpu_custom_call.1} parent=11 // pred_check
          %p243 = pneg %p131
        $region26: #{tpu_custom_call.1} parent=11 // pred_check_branch
          %245 = sbr.rel (%p243) target = $region28
        $region27: #{tpu_custom_call.1} parent=11 // pred_region
          _
        $region28: #{tpu_custom_call.1} parent=11 // pred_fallthru
          _
        // Predicated region
        $region29: #{tpu_custom_call.1} parent=11 // pred_check
          %p246 = pneg %p152
        $region30: #{tpu_custom_call.1} parent=11 // pred_check_branch
          %248 = sbr.rel (%p246) target = $region32
        $region31: #{tpu_custom_call.1} parent=11 // pred_region
          %s250 = ssub.s32 1024, 1024
          %251 = vsyncadd [#allocation9], %s250
          %s252 = sshll.u32 [#allocation8], 4
          %s253 = int_to_ptr.vmem [resolvable:$true] %s252
          %258 = dma.hbm_to_vmem [thread:$0]  %s5, 1024, %s253, [#allocation9], 64, 64, 4
        $region32: #{tpu_custom_call.1} parent=11 // pred_fallthru
          _
        // Predicated region
        $region33: #{tpu_custom_call.1} parent=11 // pred_check
          %p259 = pneg %p173
        $region34: #{tpu_custom_call.1} parent=11 // pred_check_branch
          %261 = sbr.rel (%p259) target = $region36
        $region35: #{tpu_custom_call.1} parent=11 // pred_region
          _
        $region36: #{tpu_custom_call.1} parent=11 // pred_fallthru
          _
      $region12: #{tpu_custom_call.1} parent=5 // pred_fallthru
        _
      %p262 = scmp.lt.s32.totalorder %s21, 2
      // Predicated region
      $region37: #{tpu_custom_call.1} parent=5 // pred_check
        %p263 = pneg %p262
      $region38: #{tpu_custom_call.1} parent=5 // pred_check_branch
        %265 = sbr.rel (%p263) target = $region40
      $region39: #{tpu_custom_call.1} parent=5 // pred_region
        // Predicated region
        $region41: #{tpu_custom_call.1} parent=39 // pred_check
          %p266 = pneg %p41
        $region42: #{tpu_custom_call.1} parent=39 // pred_check_branch
          %268 = sbr.rel (%p266) target = $region44
        $region43: #{tpu_custom_call.1} parent=39 // pred_region
          %s269 = sand.u32 %s31, 1
          %s270 = scalar_lea.sflag [#allocation3], %s269
          %s271 = sand.u32 %s31, 1
          %s272 = smul.addr %s271, 8
          %s273 = scalar_lea.vmem [#allocation2], %s272
          %s275 = ssub.s32 128, 128
          %276 = vsyncadd %s270, %s275
          %s277 = smul.addr %s21, 128
          %s278 = scalar_lea.hbm %s0, %s277
          %s280 = sshll.u32 %s273, 4
          %s281 = int_to_ptr.vmem [resolvable:$true] %s280
          %283 = dma.hbm_to_vmem [thread:$0]  %s278, 128, %s281, %s270
        $region44: #{tpu_custom_call.1} parent=39 // pred_fallthru
          _
      $region40: #{tpu_custom_call.1} parent=5 // pred_fallthru
        _
      %p284 = scmp.le.s32.totalorder 1, %s21
      %p285 = scmp.lt.s32.totalorder %s21, 3
      %p286 = pnand %p284, %p285
      %p287 = pneg %p286
      // Predicated region
      $region45: #{tpu_custom_call.1} parent=5 // pred_check
        _
      $region46: #{tpu_custom_call.1} parent=5 // pred_check_branch
        %289 = sbr.rel (%p286) target = $region48
      $region47: #{tpu_custom_call.1} parent=5 // pred_region
        %s290 = ssub.s32 %s21, 1
        %s291 = sand.u32 %s34, 1
        %s292 = scalar_lea.sflag [#allocation3], %s291
        %s293 = sand.u32 %s34, 1
        %s294 = smul.addr %s293, 8
        %s295 = scalar_lea.vmem [#allocation2], %s294
        // Predicated region
        $region49: #{tpu_custom_call.1} parent=47 // pred_check
          %p296 = pneg %p47
        $region50: #{tpu_custom_call.1} parent=47 // pred_check_branch
          %298 = sbr.rel (%p296) target = $region52
        $region51: #{tpu_custom_call.1} parent=47 // pred_region
          %299 = dma.done %s292, 128
        $region52: #{tpu_custom_call.1} parent=47 // pred_fallthru
          _
        // Predicated region
        $region53: #{tpu_custom_call.1} parent=47 // pred_check
          %p300 = pneg %p68
        $region54: #{tpu_custom_call.1} parent=47 // pred_check_branch
          %302 = sbr.rel (%p300) target = $region56
        $region55: #{tpu_custom_call.1} parent=47 // pred_region
          %303 = dma.done [#allocation6], 128
        $region56: #{tpu_custom_call.1} parent=47 // pred_fallthru
          _
        // Predicated region
        $region57: #{tpu_custom_call.1} parent=47 // pred_check
          %p304 = pneg %p110
        $region58: #{tpu_custom_call.1} parent=47 // pred_check_branch
          %306 = sbr.rel (%p304) target = $region60
        $region59: #{tpu_custom_call.1} parent=47 // pred_region
          %307 = dma.done [#allocation6], 1024
        $region60: #{tpu_custom_call.1} parent=47 // pred_fallthru
          _
        // Predicated region
        $region61: #{tpu_custom_call.1} parent=47 // pred_check
          %p308 = pneg %p152
        $region62: #{tpu_custom_call.1} parent=47 // pred_check_branch
          %310 = sbr.rel (%p308) target = $region64
        $region63: #{tpu_custom_call.1} parent=47 // pred_region
          %311 = dma.done [#allocation9], 1024
        $region64: #{tpu_custom_call.1} parent=47 // pred_fallthru
          _
        %s312 = sand.u32 %s34, 1
        %s313 = scalar_lea.sflag [#allocation3], %s312
        %s314 = sand.u32 %s34, 1
        %s315 = smul.addr %s314, 8
        %s316 = scalar_lea.vmem [#allocation2], %s315
        %p317 = pneg %p47
        %p318 = pneg %p44
        %p319 = pneg %p68
        %p320 = pneg %p65
        %p321 = pneg %p89
        %p322 = pneg %p86
        %p323 = pneg %p110
        %p324 = pneg %p107
        %p325 = pneg %p131
        %p326 = pneg %p128
        %p327 = pneg %p152
        %p328 = pneg %p149
        %p329 = pneg %p173
        %p330 = pneg %p170
        %p331 = pneg %p199
        %p332 = pneg %p196
        %s333 = sand.u32 %s186, 1
        %s334 = scalar_lea.sflag [#allocation4], %s333
        %s335 = sand.u32 %s186, 1
        %s336 = smul.addr %s335, 8
        %s337 = scalar_lea.vmem [#allocation10], %s336
        %v339 = vld [vmem:[%s295] sm:$0xff]
        %v340 = vpack.c.bf16 %v339, %v339
        %v341 = vld [vmem:[#allocation5] sm:$0xf]
        %v342 = vld [vmem:[#allocation5 + $0x4] sm:$0xf]
        %v343 = vld [vmem:[%s2] sm:$0x1]
        %v345 = vlaneseq
        %v346 = vshrl.u32 %v345, 7
        %v347 = vsub.s32 0, %v346
        %v348 = vrot.slane %v343, %v347
        %v352 = vunpack.c.l.b16 %v341
        %v353 = vunpack.c.l.b16 %v342
        %v354 = vpack.c.b16 %v353, %v352
        %vm356 = vcmask 130048
        %v358 = vsel %vm356, %v340, 0
        %360 = vmatprep.subr.bf16.mxu0 0
        %361 = vmatpush1.bf16.msra.mxu0 %v354
        %362 = vmatprep.subr.bf16.mxu0 0
        %363 = vmatpush1.bf16.msra.mxu0 0
        %364 = vmatprep.subr.bf16.mxu0 0
        %365 = vmatpush1.bf16.msra.mxu0 0
        %366 = vmatprep.subr.bf16.mxu0 0
        %367 = vmatpush1.bf16.msra.mxu0 0
        %368 = vmatprep.subr.bf16.mxu0 0
        %369 = vmatpush1.bf16.msra.mxu0 0
        %370 = vmatprep.subr.bf16.mxu0 0
        %371 = vmatpush1.bf16.msra.mxu0 0
        %372 = vmatprep.subr.bf16.mxu0 0
        %373 = vmatpush1.bf16.msra.mxu0 0
        %374 = vmatprep.subr.bf16.mxu0 0
        %375 = vmatpush1.bf16.msra.mxu0 0
        %376 = vmatprep.subr.bf16.mxu0 0
        %377 = vmatpush1.bf16.msra.mxu0 0
        %378 = vmatprep.subr.bf16.mxu0 0
        %379 = vmatpush1.bf16.msra.mxu0 0
        %380 = vmatprep.subr.bf16.mxu0 0
        %381 = vmatpush1.bf16.msra.mxu0 0
        %382 = vmatprep.subr.bf16.mxu0 0
        %383 = vmatpush1.bf16.msra.mxu0 0
        %384 = vmatprep.subr.bf16.mxu0 0
        %385 = vmatpush1.bf16.msra.mxu0 0
        %386 = vmatprep.subr.bf16.mxu0 0
        %387 = vmatpush1.bf16.msra.mxu0 0
        %388 = vmatprep.subr.bf16.mxu0 0
        %389 = vmatpush1.bf16.msra.mxu0 0
        %390 = vmatprep.subr.bf16.mxu0 0
        %391 = vmatpush1.bf16.msra.mxu0 0
        %392 = vmatprep.mubr.bf16.mxu0 0
        %393 = vmatmul.mubr.bf16.gmra.mrb[0].mxu0 %v358
        %v394 = vpop.f32.mrb[0].mxu0
        %v395 = vadd.f32 %v348, %v394
        %v396 = vpop.f32.mrb[0].mxu0
        %v397 = vpop.f32.mrb[0].mxu0
        %v398 = vpop.f32.mrb[0].mxu0
        %399 = vdwg.mxu0
        %v400 = vmax.f32 %v395, 0.0
        %v401 = vpack.c.bf16 %v400, %v400
        %v402 = vld [vmem:[#allocation7] sm:$0xf]
        %v403 = vld [vmem:[#allocation7 + $0x4] sm:$0xf]
        %v404 = vld [vmem:[#allocation7 + $0x8] sm:$0xf]
        %v405 = vld [vmem:[#allocation7 + $0xc] sm:$0xf]
        %v406 = vld [vmem:[#allocation7 + $0x10] sm:$0xf]
        %v407 = vld [vmem:[#allocation7 + $0x14] sm:$0xf]
        %v408 = vld [vmem:[#allocation7 + $0x18] sm:$0xf]
        %v409 = vld [vmem:[#allocation7 + $0x1c] sm:$0xf]
        %v410 = vld [vmem:[#allocation7 + $0x20] sm:$0xf]
        %v411 = vld [vmem:[#allocation7 + $0x24] sm:$0xf]
        %v412 = vld [vmem:[#allocation7 + $0x28] sm:$0xf]
        %v413 = vld [vmem:[#allocation7 + $0x2c] sm:$0xf]
        %v414 = vld [vmem:[#allocation7 + $0x30] sm:$0xf]
        %v415 = vld [vmem:[#allocation7 + $0x34] sm:$0xf]
        %v416 = vld [vmem:[#allocation7 + $0x38] sm:$0xf]
        %v417 = vld [vmem:[#allocation7 + $0x3c] sm:$0xf]
        %v418 = vld [vmem:[%s4] sm:$0x1]
        %v420 = vlaneseq
        %v421 = vshrl.u32 %v420, 7
        %v422 = vsub.s32 0, %v421
        %v423 = vrot.slane %v418, %v422
        %v441 = vunpack.c.l.b16 %v402
        %v442 = vunpack.c.l.b16 %v403
        %v443 = vunpack.c.l.b16 %v404
        %v444 = vunpack.c.l.b16 %v405
        %v445 = vunpack.c.l.b16 %v406
        %v446 = vunpack.c.l.b16 %v407
        %v447 = vunpack.c.l.b16 %v408
        %v448 = vunpack.c.l.b16 %v409
        %v449 = vunpack.c.l.b16 %v410
        %v450 = vunpack.c.l.b16 %v411
        %v451 = vunpack.c.l.b16 %v412
        %v452 = vunpack.c.l.b16 %v413
        %v453 = vunpack.c.l.b16 %v414
        %v454 = vunpack.c.l.b16 %v415
        %v455 = vunpack.c.l.b16 %v416
        %v456 = vunpack.c.l.b16 %v417
        %v457 = vpack.c.b16 %v442, %v441
        %v458 = vpack.c.b16 %v444, %v443
        %v459 = vpack.c.b16 %v446, %v445
        %v460 = vpack.c.b16 %v448, %v447
        %v461 = vpack.c.b16 %v450, %v449
        %v462 = vpack.c.b16 %v452, %v451
        %v463 = vpack.c.b16 %v454, %v453
        %v464 = vpack.c.b16 %v456, %v455
        %473 = vmatprep.subr.bf16.mxu0 0
        %474 = vmatpush1.bf16.msra.mxu0 %v457
        %475 = vmatprep.subr.bf16.mxu0 0
        %476 = vmatpush1.bf16.msra.mxu0 %v458
        %477 = vmatprep.subr.bf16.mxu0 0
        %478 = vmatpush1.bf16.msra.mxu0 %v459
        %479 = vmatprep.subr.bf16.mxu0 0
        %480 = vmatpush1.bf16.msra.mxu0 %v460
        %481 = vmatprep.subr.bf16.mxu0 0
        %482 = vmatpush1.bf16.msra.mxu0 %v461
        %483 = vmatprep.subr.bf16.mxu0 0
        %484 = vmatpush1.bf16.msra.mxu0 %v462
        %485 = vmatprep.subr.bf16.mxu0 0
        %486 = vmatpush1.bf16.msra.mxu0 %v463
        %487 = vmatprep.subr.bf16.mxu0 0
        %488 = vmatpush1.bf16.msra.mxu0 %v464
        %489 = vmatprep.subr.bf16.mxu0 0
        %490 = vmatpush1.bf16.msra.mxu0 0
        %491 = vmatprep.subr.bf16.mxu0 0
        %492 = vmatpush1.bf16.msra.mxu0 0
        %493 = vmatprep.subr.bf16.mxu0 0
        %494 = vmatpush1.bf16.msra.mxu0 0
        %495 = vmatprep.subr.bf16.mxu0 0
        %496 = vmatpush1.bf16.msra.mxu0 0
        %497 = vmatprep.subr.bf16.mxu0 0
        %498 = vmatpush1.bf16.msra.mxu0 0
        %499 = vmatprep.subr.bf16.mxu0 0
        %500 = vmatpush1.bf16.msra.mxu0 0
        %501 = vmatprep.subr.bf16.mxu0 0
        %502 = vmatpush1.bf16.msra.mxu0 0
        %503 = vmatprep.subr.bf16.mxu0 0
        %504 = vmatpush1.bf16.msra.mxu0 0
        %505 = vmatprep.mubr.bf16.mxu0 0
        %506 = vmatmul.mubr.bf16.gmra.mrb[0].mxu0 %v401
        %v507 = vpop.f32.mrb[0].mxu0
        %v508 = vadd.f32 %v423, %v507
        %v509 = vpop.f32.mrb[0].mxu0
        %v510 = vpop.f32.mrb[0].mxu0
        %v511 = vpop.f32.mrb[0].mxu0
        %512 = vdwg.mxu0
        %v513 = vmax.f32 %v508, 0.0
        %v514 = vpack.c.bf16 %v513, %v513
        %v515 = vld [vmem:[#allocation8] sm:$0xf]
        %v516 = vld [vmem:[#allocation8 + $0x4] sm:$0xf]
        %v517 = vld [vmem:[#allocation8 + $0x8] sm:$0xf]
        %v518 = vld [vmem:[#allocation8 + $0xc] sm:$0xf]
        %v519 = vld [vmem:[#allocation8 + $0x10] sm:$0xf]
        %v520 = vld [vmem:[#allocation8 + $0x14] sm:$0xf]
        %v521 = vld [vmem:[#allocation8 + $0x18] sm:$0xf]
        %v522 = vld [vmem:[#allocation8 + $0x1c] sm:$0xf]
        %v523 = vld [vmem:[#allocation8 + $0x20] sm:$0xf]
        %v524 = vld [vmem:[#allocation8 + $0x24] sm:$0xf]
        %v525 = vld [vmem:[#allocation8 + $0x28] sm:$0xf]
        %v526 = vld [vmem:[#allocation8 + $0x2c] sm:$0xf]
        %v527 = vld [vmem:[#allocation8 + $0x30] sm:$0xf]
        %v528 = vld [vmem:[#allocation8 + $0x34] sm:$0xf]
        %v529 = vld [vmem:[#allocation8 + $0x38] sm:$0xf]
        %v530 = vld [vmem:[#allocation8 + $0x3c] sm:$0xf]
        %v531 = vld [vmem:[%s6] sm:$0x1]
        %v533 = vlaneseq
        %v534 = vshrl.u32 %v533, 7
        %v535 = vsub.s32 0, %v534
        %v536 = vrot.slane %v531, %v535
        %v554 = vunpack.c.l.b16 %v515
        %v555 = vunpack.c.l.b16 %v516
        %v556 = vunpack.c.l.b16 %v517
        %v557 = vunpack.c.l.b16 %v518
        %v558 = vunpack.c.l.b16 %v519
        %v559 = vunpack.c.l.b16 %v520
        %v560 = vunpack.c.l.b16 %v521
        %v561 = vunpack.c.l.b16 %v522
        %v562 = vunpack.c.l.b16 %v523
        %v563 = vunpack.c.l.b16 %v524
        %v564 = vunpack.c.l.b16 %v525
        %v565 = vunpack.c.l.b16 %v526
        %v566 = vunpack.c.l.b16 %v527
        %v567 = vunpack.c.l.b16 %v528
        %v568 = vunpack.c.l.b16 %v529
        %v569 = vunpack.c.l.b16 %v530
        %v570 = vpack.c.b16 %v555, %v554
        %v571 = vpack.c.b16 %v557, %v556
        %v572 = vpack.c.b16 %v559, %v558
        %v573 = vpack.c.b16 %v561, %v560
        %v574 = vpack.c.b16 %v563, %v562
        %v575 = vpack.c.b16 %v565, %v564
        %v576 = vpack.c.b16 %v567, %v566
        %v577 = vpack.c.b16 %v569, %v568
        %586 = vmatprep.subr.bf16.mxu0 0
        %587 = vmatpush1.bf16.msra.mxu0 %v570
        %588 = vmatprep.subr.bf16.mxu0 0
        %589 = vmatpush1.bf16.msra.mxu0 %v571
        %590 = vmatprep.subr.bf16.mxu0 0
        %591 = vmatpush1.bf16.msra.mxu0 %v572
        %592 = vmatprep.subr.bf16.mxu0 0
        %593 = vmatpush1.bf16.msra.mxu0 %v573
        %594 = vmatprep.subr.bf16.mxu0 0
        %595 = vmatpush1.bf16.msra.mxu0 %v574
        %596 = vmatprep.subr.bf16.mxu0 0
        %597 = vmatpush1.bf16.msra.mxu0 %v575
        %598 = vmatprep.subr.bf16.mxu0 0
        %599 = vmatpush1.bf16.msra.mxu0 %v576
        %600 = vmatprep.subr.bf16.mxu0 0
        %601 = vmatpush1.bf16.msra.mxu0 %v577
        %602 = vmatprep.subr.bf16.mxu0 0
        %603 = vmatpush1.bf16.msra.mxu0 0
        %604 = vmatprep.subr.bf16.mxu0 0
        %605 = vmatpush1.bf16.msra.mxu0 0
        %606 = vmatprep.subr.bf16.mxu0 0
        %607 = vmatpush1.bf16.msra.mxu0 0
        %608 = vmatprep.subr.bf16.mxu0 0
        %609 = vmatpush1.bf16.msra.mxu0 0
        %610 = vmatprep.subr.bf16.mxu0 0
        %611 = vmatpush1.bf16.msra.mxu0 0
        %612 = vmatprep.subr.bf16.mxu0 0
        %613 = vmatpush1.bf16.msra.mxu0 0
        %614 = vmatprep.subr.bf16.mxu0 0
        %615 = vmatpush1.bf16.msra.mxu0 0
        %616 = vmatprep.subr.bf16.mxu0 0
        %617 = vmatpush1.bf16.msra.mxu0 0
        %618 = vmatprep.mubr.bf16.mxu0 0
        %619 = vmatmul.mubr.bf16.gmra.mrb[0].mxu0 %v514
        %v620 = vpop.f32.mrb[0].mxu0
        %v621 = vadd.f32 %v536, %v620
        %v622 = vpop.f32.mrb[0].mxu0
        %v623 = vpop.f32.mrb[0].mxu0
        %v624 = vpop.f32.mrb[0].mxu0
        %625 = vdwg.mxu0
        %626 = vst [vmem:[%s337] sm:$0xff] %v621
        %s627 = sand.u32 %s186, 1
        %s628 = scalar_lea.sflag [#allocation4], %s627
        %s629 = sand.u32 %s186, 1
        %s630 = smul.addr %s629, 8
        %s631 = scalar_lea.vmem [#allocation10], %s630
        // Predicated region
        $region65: #{tpu_custom_call.1} parent=47 // pred_check
          %p632 = pneg %p196
        $region66: #{tpu_custom_call.1} parent=47 // pred_check_branch
          %634 = sbr.rel (%p632) target = $region68
        $region67: #{tpu_custom_call.1} parent=47 // pred_region
          %s636 = ssub.s32 128, 128
          %637 = vsyncadd %s628, %s636
          %s638 = smul.addr %s26, 128
          %s639 = scalar_lea.hbm %s7, %s638
          %s641 = sshll.u32 %s631, 4
          %s642 = int_to_ptr.vmem [resolvable:$true] %s641
          %644 = dma.vmem_to_hbm [thread:$0]  %s642, 128, %s639, %s628
        $region68: #{tpu_custom_call.1} parent=47 // pred_fallthru
          _
      $region48: #{tpu_custom_call.1} parent=5 // pred_fallthru
        _
      %p645 = scmp.le.s32.totalorder 2, %s21
      // Predicated region
      $region69: #{tpu_custom_call.1} parent=5 // pred_check
        %p646 = pneg %p645
      $region70: #{tpu_custom_call.1} parent=5 // pred_check_branch
        %648 = sbr.rel (%p646) target = $region72
      $region71: #{tpu_custom_call.1} parent=5 // pred_region
        %s649 = ssub.s32 %s21, 2
        // Predicated region
        $region73: #{tpu_custom_call.1} parent=71 // pred_check
          %p650 = pneg %p202
        $region74: #{tpu_custom_call.1} parent=71 // pred_check_branch
          %652 = sbr.rel (%p650) target = $region76
        $region75: #{tpu_custom_call.1} parent=71 // pred_region
          %s653 = sand.u32 %s187, 1
          %s654 = scalar_lea.sflag [#allocation4], %s653
          %s655 = sand.u32 %s187, 1
          %s656 = smul.addr %s655, 8
          %s657 = scalar_lea.vmem [#allocation10], %s656
          %658 = dma.done %s654, 128
        $region76: #{tpu_custom_call.1} parent=71 // pred_fallthru
          _
      $region72: #{tpu_custom_call.1} parent=5 // pred_fallthru
        _
    $region6: #{tpu_custom_call.1} parent=1 // loop_footer
      %s25 = sadd.s32 1, %s21
    $region7: #{tpu_custom_call.1} parent=1 // loop_footer_branch
      %20 = sbr.rel target = $region3
    $region8: #{tpu_custom_call.1} parent=1 // loop_exit
      _
    %659 = vsyncpa [#allocation3], 1
    %s660 = scalar_lea.sflag [#allocation3], 1
    %661 = vsyncpa %s660, 1
    %662 = vsyncpa [#allocation6], 1
    %663 = vsyncpa [#allocation9], 1
    %664 = vsyncpa [#allocation4], 1
    %s665 = scalar_lea.sflag [#allocation4], 1
    %666 = vsyncpa %s665, 1

</llo_original>
